<compile_context>
chip_gen: v7x
topology: tpu7x:2x2x1
jax: 0.10.0
libtpu: 0.0.40
codegen_flags: <defaults>
</compile_context>

<pallas_src>
import functools

import jax
import jax.numpy as jnp
from jax import lax
from jax.experimental import pallas as pl
from jax.experimental.pallas import tpu as pltpu


def _stance_loss_kernel(fq_ref, fk_ref, labk_ref, labq_ref, out_ref,
                        qn_ref, pos_acc, sum_acc, *, temperature, use_bf16_matmul):
    qi = pl.program_id(0)          # query-row tile (parallel axis)
    ki = pl.program_id(1)          # key tile       (reduction axis, last)
    nk = pl.num_programs(1)

    inv_sqrt_t = 1.0 / (float(temperature) ** 0.5)

    @pl.when(ki == 0)
    def _():
        pos_acc[...] = jnp.zeros_like(pos_acc)
        sum_acc[...] = jnp.zeros_like(sum_acc)
        # Normalize the query tile once per row-tile and cache it (with 1/sqrt(T)
        # folded in) for all nk key tiles.  torch F.normalize clamps the norm at
        # 1e-12 <=> clamp sum-of-squares at 1e-24.
        fq = fq_ref[...].astype(jnp.float32)
        q_scale = lax.rsqrt(
            jnp.maximum(jnp.sum(fq * fq, axis=1, keepdims=True), 1e-24)) * inv_sqrt_t
        qn_ref[...] = (fq * q_scale).astype(qn_ref.dtype)

    fk = fk_ref[...].astype(jnp.float32)     # (tk, D) key rows
    k_scale = lax.rsqrt(
        jnp.maximum(jnp.sum(fk * fk, axis=1, keepdims=True), 1e-24)) * inv_sqrt_t
    fkn = (fk * k_scale).astype(qn_ref.dtype)
    fqn = qn_ref[...]                        # (tq, D) cached normalized query rows

    # Logits are bounded by 1/T because rows are L2-normalized, so exp() cannot overflow
    # in f32 (exp(1/0.07) ~ 1.6e6).  Keys on sublanes / queries on lanes: per-query
    # reductions land lane-dense, no transpose needed for the output.
    sim = jnp.exp(
        lax.dot_general(fkn, fqn, (((1,), (1,)), ((), ())),
                        preferred_element_type=jnp.float32))          # (tk, tq)

    tk, tq = sim.shape
    # logits_mask: remove self-similarity by absolute-index comparison (per-tile iotas).
    key_abs = ki * tk + lax.broadcasted_iota(jnp.int32, (tk, tq), 0)
    qry_abs = qi * tq + lax.broadcasted_iota(jnp.int32, (tk, tq), 1)
    off_diag = key_abs != qry_abs

    same = labk_ref[...] == labq_ref[...]      # (tk,1) vs (1,tq) -> (tk,tq) label equality

    sim_od = jnp.where(off_diag, sim, 0.0)
    # S_j = sum_{k!=j} sim_kj ;  P_j = sum_{k!=j, same label} sim_kj
    sum_acc[...] += jnp.sum(sim_od, axis=0, keepdims=True)                        # (1, tq)
    pos_acc[...] += jnp.sum(jnp.where(same, sim_od, 0.0), axis=0, keepdims=True)  # (1, tq)

    @pl.when(ki == nk - 1)
    def _():
        s = sum_acc[...]
        # mask = eq + 1e-7  =>  pos = P + 1e-7*S,  neg = S - pos,  pos + neg == S
        pos = pos_acc[...] + 1e-7 * s
        out_ref[...] = jnp.log(pos / s)        # per-query log(pos/(pos+neg)), lane-dense


def _pick_tile(n, candidates=(256, 128)):
    # 256-aligned tiles feed the v6e/v7x 256x256 MXU; 128 also matches v5e's 128x128 MXU
    # and stays well inside the default scoped VMEM. Fall back to a single tile (full
    # extent) if B is not a multiple of 128.
    for c in candidates:
        if n % c == 0:
            return c
    return n


def stance_loss(features, labels, temperature=0.07, *, block_q=None, block_k=None,
                use_bf16_matmul=False):
    """features: [B, D] float, labels: [B] class ids. Returns scalar loss.

    TODO(synk): only the `labels` path of StanceLoss.forward is implemented; the
    labels=None (identity mask) and explicit `mask=` branches are not wired up.
    """
    B, D = features.shape
    tq = block_q if block_q is not None else _pick_tile(B)
    tk = block_k if block_k is not None else _pick_tile(B)
    assert B % tq == 0 and B % tk == 0, "tile sizes must divide the batch"

    if jnp.issubdtype(labels.dtype, jnp.integer):
        lab = labels.astype(jnp.int32)
    else:
        lab = labels.astype(jnp.float32)
    lab_col = lab.reshape(B, 1)    # keys   down the sublane axis
    lab_row = lab.reshape(1, B)    # queries across the lane axis

    nq, nk = B // tq, B // tk
    grid = (nq, nk)
    mm_dtype = jnp.bfloat16 if use_bf16_matmul else jnp.float32
    kernel = functools.partial(_stance_loss_kernel,
                               temperature=float(temperature),
                               use_bf16_matmul=use_bf16_matmul)

    per_row = pl.pallas_call(
        kernel,
        out_shape=jax.ShapeDtypeStruct((1, B), jnp.float32),
        grid_spec=pltpu.PrefetchScalarGridSpec(
            num_scalar_prefetch=0,
            grid=grid,
            in_specs=[
                pl.BlockSpec((tq, D), lambda qi, ki: (qi, 0)),   # query feature rows
                pl.BlockSpec((tk, D), lambda qi, ki: (ki, 0)),   # key   feature rows
                pl.BlockSpec((tk, 1), lambda qi, ki: (ki, 0)),   # key   labels (column)
                pl.BlockSpec((1, tq), lambda qi, ki: (0, qi)),   # query labels (row)
            ],
            out_specs=pl.BlockSpec((1, tq), lambda qi, ki: (0, qi)),
            scratch_shapes=[pltpu.VMEM((tq, D), mm_dtype),       # cached normalized queries
                            pltpu.VMEM((1, tq), jnp.float32),    # pos accumulator
                            pltpu.VMEM((1, tq), jnp.float32)],   # off-diag rowsum
        ),
        compiler_params=pltpu.CompilerParams(
            dimension_semantics=("parallel", "arbitrary")),
        cost_estimate=pl.CostEstimate(
            flops=2 * B * B * D,
            transcendentals=B * B,
            bytes_accessed=(nq + nk) * B * D * features.dtype.itemsize
                           + (nq * nk + nq) * B * 4 + B * 4),
    )(features, features, lab_col, lab_row)

    return -jnp.mean(per_row)


def stance_loss_ref(features, labels, temperature=0.07):
    """Pure-JAX reference mirroring the PyTorch forward (labels path)."""
    f = features.astype(jnp.float32)
    f = f / jnp.maximum(jnp.linalg.norm(f, axis=1, keepdims=True), 1e-12)
    sim = jnp.exp((f @ f.T) / temperature)
    lab = labels.reshape(-1, 1)
    mask = (lab == lab.T).astype(jnp.float32) + 1e-7
    B = features.shape[0]
    logits_mask = 1.0 - jnp.eye(B, dtype=jnp.float32)
    pos = jnp.sum(sim * (mask * logits_mask), axis=1)
    neg = jnp.sum(sim * ((1.0 - mask) * logits_mask), axis=1)
    return -jnp.mean(jnp.log(pos / (pos + neg)))


if __name__ == "__main__":
    key = jax.random.PRNGKey(0)
    kf, kl, kf2, kl2 = jax.random.split(key, 4)
    temperature = 0.07

    # small shapes consistent with the module: [batch, hidden]
    B, D = 8, 32
    features = jax.random.normal(kf, (B, D), dtype=jnp.float32)
    labels = jax.random.randint(kl, (B,), 0, 3, dtype=jnp.int32)

    loss = jax.block_until_ready(stance_loss(features, labels, temperature))
    ref = stance_loss_ref(features, labels, temperature)
    assert jnp.isfinite(loss), "loss is not finite"
    assert jnp.allclose(loss, ref, rtol=1e-4, atol=1e-4), (loss, ref)

    # multi-tile path: grid=(2, 2), exercises the accumulators, the cached-query scratch,
    # cross-tile diagonal masking and the megacore-parallel row axis.
    B2, D2 = 256, 64
    features2 = jax.random.normal(kf2, (B2, D2), dtype=jnp.float32)
    labels2 = jax.random.randint(kl2, (B2,), 0, 3, dtype=jnp.int32)
    loss2 = jax.block_until_ready(
        stance_loss(features2, labels2, temperature, block_q=128, block_k=128))
    ref2 = stance_loss_ref(features2, labels2, temperature)
    assert jnp.isfinite(loss2), "tiled loss is not finite"
    assert jnp.allclose(loss2, ref2, rtol=1e-4, atol=1e-4), (loss2, ref2)

    print("KERNEL_OK")
</pallas_src>

<mosaic_0001>
module attributes {stable_mosaic.version = 11 : i64} {
  func.func @_stance_loss_kernel(%arg0: i32, %arg1: i32, %arg2: memref<8x32xf32, #tpu.memory_space<vmem>>, %arg3: memref<8x32xf32, #tpu.memory_space<vmem>>, %arg4: memref<8x1xi32, #tpu.memory_space<vmem>>, %arg5: memref<1x8xi32, #tpu.memory_space<vmem>>, %arg6: memref<1x8xf32, #tpu.memory_space<vmem>>, %arg7: memref<8x32xf32, #tpu.memory_space<vmem>>, %arg8: memref<1x8xf32, #tpu.memory_space<vmem>>, %arg9: memref<1x8xf32, #tpu.memory_space<vmem>>) attributes {dimension_semantics = [#tpu.dimension_semantics<parallel>, #tpu.dimension_semantics<arbitrary>], iteration_bounds = array<i64: 1, 1>, scalar_prefetch = 0 : i64, scratch_operands = 3 : i64, tpu.core_type = #tpu.core_type<tc>, window_params = [{transform_indices = @transform_0, window_bounds = array<i64: 8, 32>}, {transform_indices = @transform_1, window_bounds = array<i64: 8, 32>}, {transform_indices = @transform_2, window_bounds = array<i64: 8, 1>}, {transform_indices = @transform_3, window_bounds = array<i64: 1, 8>}, {transform_indices = @transform_4, window_bounds = array<i64: 1, 8>}]} {
    %c0_i32 = arith.constant 0 : i32
    %0 = arith.cmpi eq, %arg1, %c0_i32 : i32
    %1 = arith.extui %0 : i1 to i32
    %c0_i32_0 = arith.constant 0 : i32
    %2 = arith.cmpi ne, %1, %c0_i32_0 : i32
    scf.if %2 {
      %cst_26 = arith.constant 0.000000e+00 : f32
      %48 = vector.broadcast %cst_26 : f32 to vector<1x8xf32>
      %c0_27 = arith.constant 0 : index
      %c0_28 = arith.constant 0 : index
      %49 = vector.load %arg8[%c0_27, %c0_28] : memref<1x8xf32, #tpu.memory_space<vmem>>, vector<1x8xf32>
      tpu.vector_store %arg8[%c0_27, %c0_28], %48 {strides = array<i32>} : memref<1x8xf32, #tpu.memory_space<vmem>>, vector<1x8xf32>,
      %cst_29 = arith.constant 0.000000e+00 : f32
      %50 = vector.broadcast %cst_29 : f32 to vector<1x8xf32>
      %c0_30 = arith.constant 0 : index
      %c0_31 = arith.constant 0 : index
      %51 = vector.load %arg9[%c0_30, %c0_31] : memref<1x8xf32, #tpu.memory_space<vmem>>, vector<1x8xf32>
      tpu.vector_store %arg9[%c0_30, %c0_31], %50 {strides = array<i32>} : memref<1x8xf32, #tpu.memory_space<vmem>>, vector<1x8xf32>,
      %c0_32 = arith.constant 0 : index
      %c0_33 = arith.constant 0 : index
      %52 = vector.load %arg2[%c0_32, %c0_33] : memref<8x32xf32, #tpu.memory_space<vmem>>, vector<8x32xf32>
      %53 = arith.mulf %52, %52 : vector<8x32xf32>
      %cst_34 = arith.constant dense<0.000000e+00> : vector<8xf32>
      %54 = vector.multi_reduction <add>, %53, %cst_34 [1] : vector<8x32xf32> to vector<8xf32>
      %55 = vector.shape_cast %54 : vector<8xf32> to vector<8x1xf32>
      %cst_35 = arith.constant 1.000000e-24 : f32
      %56 = vector.broadcast %cst_35 : f32 to vector<8x1xf32>
      %57 = arith.maximumf %55, %56 : vector<8x1xf32>
      %58 = math.rsqrt %57 : vector<8x1xf32>
      %cst_36 = arith.constant 3.77964473 : f32
      %59 = vector.broadcast %cst_36 : f32 to vector<8x1xf32>
      %60 = arith.mulf %58, %59 : vector<8x1xf32>
      %61 = vector.broadcast %60 : vector<8x1xf32> to vector<8x32xf32>
      %62 = arith.mulf %52, %61 : vector<8x32xf32>
      %c0_37 = arith.constant 0 : index
      %c0_38 = arith.constant 0 : index
      %63 = vector.load %arg7[%c0_37, %c0_38] : memref<8x32xf32, #tpu.memory_space<vmem>>, vector<8x32xf32>
      tpu.vector_store %arg7[%c0_37, %c0_38], %62 {strides = array<i32>} : memref<8x32xf32, #tpu.memory_space<vmem>>, vector<8x32xf32>,
    } else {
    }
    %c0 = arith.constant 0 : index
    %c0_1 = arith.constant 0 : index
    %3 = vector.load %arg3[%c0, %c0_1] : memref<8x32xf32, #tpu.memory_space<vmem>>, vector<8x32xf32>
    %4 = arith.mulf %3, %3 : vector<8x32xf32>
    %cst = arith.constant dense<0.000000e+00> : vector<8xf32>
    %5 = vector.multi_reduction <add>, %4, %cst [1] : vector<8x32xf32> to vector<8xf32>
    %6 = vector.shape_cast %5 : vector<8xf32> to vector<8x1xf32>
    %cst_2 = arith.constant 1.000000e-24 : f32
    %7 = vector.broadcast %cst_2 : f32 to vector<8x1xf32>
    %8 = arith.maximumf %6, %7 : vector<8x1xf32>
    %9 = math.rsqrt %8 : vector<8x1xf32>
    %cst_3 = arith.constant 3.77964473 : f32
    %10 = vector.broadcast %cst_3 : f32 to vector<8x1xf32>
    %11 = arith.mulf %9, %10 : vector<8x1xf32>
    %12 = vector.broadcast %11 : vector<8x1xf32> to vector<8x32xf32>
    %13 = arith.mulf %3, %12 : vector<8x32xf32>
    %c0_4 = arith.constant 0 : index
    %c0_5 = arith.constant 0 : index
    %14 = vector.load %arg7[%c0_4, %c0_5] : memref<8x32xf32, #tpu.memory_space<vmem>>, vector<8x32xf32>
    %cst_6 = arith.constant dense<0.000000e+00> : vector<8x8xf32>
    %15 = tpu.matmul %13, %14, %cst_6 {dimension_numbers = #tpu.dot_dimension_numbers<[1], [1], [0], [0], [0, 0, 1, 0], [], []>} : vector<8x32xf32>, vector<8x32xf32>, vector<8x8xf32> -> vector<8x8xf32>
    %16 = math.exp %15 : vector<8x8xf32>
    %c8_i32 = arith.constant 8 : i32
    %17 = arith.muli %arg1, %c8_i32 : i32
    %18 = tpu.iota {dimensions = array<i32: 0>} : vector<8x8xi32>
    %19 = vector.broadcast %17 : i32 to vector<8x8xi32>
    %20 = arith.addi %19, %18 : vector<8x8xi32>
    %c8_i32_7 = arith.constant 8 : i32
    %21 = arith.muli %arg0, %c8_i32_7 : i32
    %22 = tpu.iota {dimensions = array<i32: 1>} : vector<8x8xi32>
    %23 = vector.broadcast %21 : i32 to vector<8x8xi32>
    %24 = arith.addi %23, %22 : vector<8x8xi32>
    %25 = arith.cmpi ne, %20, %24 : vector<8x8xi32>
    %c0_8 = arith.constant 0 : index
    %c0_9 = arith.constant 0 : index
    %26 = vector.load %arg4[%c0_8, %c0_9] : memref<8x1xi32, #tpu.memory_space<vmem>>, vector<8x1xi32>
    %c0_10 = arith.constant 0 : index
    %c0_11 = arith.constant 0 : index
    %27 = vector.load %arg5[%c0_10, %c0_11] : memref<1x8xi32, #tpu.memory_space<vmem>>, vector<1x8xi32>
    %28 = vector.broadcast %26 : vector<8x1xi32> to vector<8x8xi32>
    %29 = vector.broadcast %27 : vector<1x8xi32> to vector<8x8xi32>
    %30 = arith.cmpi eq, %28, %29 : vector<8x8xi32>
    %cst_12 = arith.constant 0.000000e+00 : f32
    %31 = vector.broadcast %cst_12 : f32 to vector<8x8xf32>
    %32 = arith.select %25, %16, %31 : vector<8x8xi1>, vector<8x8xf32>
    %c0_13 = arith.constant 0 : index
    %c0_14 = arith.constant 0 : index
    %33 = vector.load %arg9[%c0_13, %c0_14] : memref<1x8xf32, #tpu.memory_space<vmem>>, vector<1x8xf32>
    %cst_15 = arith.constant dense<0.000000e+00> : vector<8xf32>
    %34 = vector.multi_reduction <add>, %32, %cst_15 [0] : vector<8x8xf32> to vector<8xf32>
    %35 = vector.shape_cast %34 : vector<8xf32> to vector<1x8xf32>
    %36 = arith.addf %33, %35 : vector<1x8xf32>
    %c0_16 = arith.constant 0 : index
    %c0_17 = arith.constant 0 : index
    %37 = vector.load %arg9[%c0_16, %c0_17] : memref<1x8xf32, #tpu.memory_space<vmem>>, vector<1x8xf32>
    tpu.vector_store %arg9[%c0_16, %c0_17], %36 {strides = array<i32>} : memref<1x8xf32, #tpu.memory_space<vmem>>, vector<1x8xf32>,
    %c0_18 = arith.constant 0 : index
    %c0_19 = arith.constant 0 : index
    %38 = vector.load %arg8[%c0_18, %c0_19] : memref<1x8xf32, #tpu.memory_space<vmem>>, vector<1x8xf32>
    %cst_20 = arith.constant 0.000000e+00 : f32
    %39 = vector.broadcast %cst_20 : f32 to vector<8x8xf32>
    %40 = arith.select %30, %32, %39 : vector<8x8xi1>, vector<8x8xf32>
    %cst_21 = arith.constant dense<0.000000e+00> : vector<8xf32>
    %41 = vector.multi_reduction <add>, %40, %cst_21 [0] : vector<8x8xf32> to vector<8xf32>
    %42 = vector.shape_cast %41 : vector<8xf32> to vector<1x8xf32>
    %43 = arith.addf %38, %42 : vector<1x8xf32>
    %c0_22 = arith.constant 0 : index
    %c0_23 = arith.constant 0 : index
    %44 = vector.load %arg8[%c0_22, %c0_23] : memref<1x8xf32, #tpu.memory_space<vmem>>, vector<1x8xf32>
    tpu.vector_store %arg8[%c0_22, %c0_23], %43 {strides = array<i32>} : memref<1x8xf32, #tpu.memory_space<vmem>>, vector<1x8xf32>,
    %c0_i32_24 = arith.constant 0 : i32
    %45 = arith.cmpi eq, %arg1, %c0_i32_24 : i32
    %46 = arith.extui %45 : i1 to i32
    %c0_i32_25 = arith.constant 0 : i32
    %47 = arith.cmpi ne, %46, %c0_i32_25 : i32
    scf.if %47 {
      %c0_26 = arith.constant 0 : index
      %c0_27 = arith.constant 0 : index
      %48 = vector.load %arg9[%c0_26, %c0_27] : memref<1x8xf32, #tpu.memory_space<vmem>>, vector<1x8xf32>
      %c0_28 = arith.constant 0 : index
      %c0_29 = arith.constant 0 : index
      %49 = vector.load %arg8[%c0_28, %c0_29] : memref<1x8xf32, #tpu.memory_space<vmem>>, vector<1x8xf32>
      %cst_30 = arith.constant 1.000000e-07 : f32
      %50 = vector.broadcast %cst_30 : f32 to vector<1x8xf32>
      %51 = arith.mulf %50, %48 : vector<1x8xf32>
      %52 = arith.addf %49, %51 : vector<1x8xf32>
      %53 = arith.divf %52, %48 : vector<1x8xf32>
      %54 = math.log %53 : vector<1x8xf32>
      %c0_31 = arith.constant 0 : index
      %c0_32 = arith.constant 0 : index
      %55 = vector.load %arg6[%c0_31, %c0_32] : memref<1x8xf32, #tpu.memory_space<vmem>>, vector<1x8xf32>
      tpu.vector_store %arg6[%c0_31, %c0_32], %54 {strides = array<i32>} : memref<1x8xf32, #tpu.memory_space<vmem>>, vector<1x8xf32>,
    } else {
    }
    return
  }
  func.func @transform_0(%arg0: i32, %arg1: i32) -> (i32, i32) {
    %c0_i32 = arith.constant 0 : i32
    %c0_i32_0 = arith.constant 0 : i32
    return %arg0, %c0_i32 : i32, i32
  }
  func.func @transform_1(%arg0: i32, %arg1: i32) -> (i32, i32) {
    %c0_i32 = arith.constant 0 : i32
    %c0_i32_0 = arith.constant 0 : i32
    return %arg1, %c0_i32 : i32, i32
  }
  func.func @transform_2(%arg0: i32, %arg1: i32) -> (i32, i32) {
    %c0_i32 = arith.constant 0 : i32
    %c0_i32_0 = arith.constant 0 : i32
    return %arg1, %c0_i32 : i32, i32
  }
  func.func @transform_3(%arg0: i32, %arg1: i32) -> (i32, i32) {
    %c0_i32 = arith.constant 0 : i32
    %c0_i32_0 = arith.constant 0 : i32
    return %c0_i32, %arg0 : i32, i32
  }
  func.func @transform_4(%arg0: i32, %arg1: i32) -> (i32, i32) {
    %c0_i32 = arith.constant 0 : i32
    %c0_i32_0 = arith.constant 0 : i32
    return %c0_i32, %arg0 : i32, i32
  }
}

</mosaic_0001>

<llo_original>
// kernel: tpu_custom_call.1
$region0: #{tpu_custom_call.1}
  #allocation0 [shape = 'u32[]', space=smem, size = 0x4, offset = 0x4, fixed_abs, tag = 'smem constant byte address 0x4 - core index']
  #allocation1 [shape = 'u32[144,128]{1,0:T(1,128)}', space=vmem, size = 0x12000, scoped, tag = 'internal scratch']
  #allocation2 [shape = 'f32[8,32]{1,0:T(8,128)}', space=vmem, size = 0x1000, scoped, tag = 'scratch operand']
  #allocation3 [shape = 'f32[1,8]{1,0:T(1,128)}', space=vmem, size = 0x200, scoped, tag = 'scratch operand']
  #allocation4 [shape = 'f32[1,8]{1,0:T(1,128)}', space=vmem, size = 0x200, scoped, tag = 'scratch operand']
  %s0 = inlined_call_operand.vmem [shape: f32[8,32], index: 0, kind: input, shape index: {}]
  %s1 = inlined_call_operand.hbm [shape: f32[8,32], index: 1, kind: input, shape index: {}]
  %s2 = inlined_call_operand.vmem [shape: s32[8,1], index: 2, kind: input, shape index: {}]
  %s3 = inlined_call_operand.vmem [shape: s32[1,8], index: 3, kind: input, shape index: {}]
  %s4 = inlined_call_operand.hbm [shape: f32[1,8], index: 4, kind: output, shape index: {}]
  %s5 = sld [smem:[#allocation0]]
  $region38: #{tpu_custom_call.1} parent=0
    _
  %s7 = ssub.s32 1, %s5
  %s8 = scalar_select 0, %s7, %s5
  $region1: #{tpu_custom_call.1} parent=0
    #allocation5 [shape = 'u8[4096]{0}', space=vmem, size = 0x1000, scoped, tag = 'input window, operand 1, single buffered']
    #allocation6 [shape = 's32[1]{0}', space=sflag, size = 0x4, scoped, tag = 'scoped memory for tpu_custom_call.1']
    #allocation7 [shape = 's32[1]{0}', space=sflag, size = 0x4, scoped, tag = 'scoped memory for tpu_custom_call.1']
    #allocation8 [shape = 'u8[512]{0}', space=vmem, size = 0x400, scoped, tag = 'output window, operand 0, single buffered']
    %9 = vsyncpa [#allocation6], 0
    %10 = vsyncpa [#allocation7], 0
    // Predicated region
    $region2: #{tpu_custom_call.1} parent=1 // pred_check
      _
    $region3: #{tpu_custom_call.1} parent=1 // pred_check_branch
      %12 = sbr.rel (0) target = $region5
    $region4: #{tpu_custom_call.1} parent=1 // pred_region
      _
    $region5: #{tpu_custom_call.1} parent=1 // pred_fallthru
      _
    // Predicated region
    $region6: #{tpu_custom_call.1} parent=1 // pred_check
      _
    $region7: #{tpu_custom_call.1} parent=1 // pred_check_branch
      %14 = sbr.rel (0) target = $region9
    $region8: #{tpu_custom_call.1} parent=1 // pred_region
      %s16 = ssub.s32 128, 128
      %17 = vsyncadd [#allocation6], %s16
      %s19 = sshll.u32 [#allocation5], 4
      %s20 = int_to_ptr.vmem [resolvable:$true] %s19
      %22 = dma.hbm_to_vmem [thread:$0]  %s1, 128, %s20, [#allocation6]
    $region9: #{tpu_custom_call.1} parent=1 // pred_fallthru
      _
    // Predicated region
    $region10: #{tpu_custom_call.1} parent=1 // pred_check
      _
    $region11: #{tpu_custom_call.1} parent=1 // pred_check_branch
      %24 = sbr.rel (0) target = $region13
    $region12: #{tpu_custom_call.1} parent=1 // pred_region
      _
    $region13: #{tpu_custom_call.1} parent=1 // pred_fallthru
      _
    // Predicated region
    $region14: #{tpu_custom_call.1} parent=1 // pred_check
      _
    $region15: #{tpu_custom_call.1} parent=1 // pred_check_branch
      %26 = sbr.rel (0) target = $region17
    $region16: #{tpu_custom_call.1} parent=1 // pred_region
      _
    $region17: #{tpu_custom_call.1} parent=1 // pred_fallthru
      _
    // Predicated region
    $region18: #{tpu_custom_call.1} parent=1 // pred_check
      _
    $region19: #{tpu_custom_call.1} parent=1 // pred_check_branch
      %28 = sbr.rel (0) target = $region21
    $region20: #{tpu_custom_call.1} parent=1 // pred_region
      %29 = dma.done [#allocation6], 128
    $region21: #{tpu_custom_call.1} parent=1 // pred_fallthru
      _
    %p30 = scmp.eq.s32.totalorder 0, 0
    // Predicated region
    $region22: #{tpu_custom_call.1} parent=1 // pred_check
      %p31 = pneg %p30
    $region23: #{tpu_custom_call.1} parent=1 // pred_check_branch
      %33 = sbr.rel (%p31) target = $region25
    $region24: #{tpu_custom_call.1} parent=1 // pred_region
      %vm34 = vcmask 57344
      %35 = vst.msk [vmem:[#allocation3] sm:$0x1] %vm34, 0.0
      %36 = vst.msk [vmem:[#allocation4] sm:$0x1] %vm34, 0.0
      %v37 = vld [vmem:[%s0] sm:$0xff]
      %v38 = vmul.f32 %v37, %v37
      %vm39 = vcmask 261120
      %v40 = vsel %vm39, %v38, 0.0
      %41 = vadd.xlane.f32.xlu0 %v40
      %v42 = vpop.xlane.xlu0 %41
      %v43 = vmax.f32 %v42, 1e-24
      %v44 = vrsqrt.pop %v43
      %v45 = vmul.f32 %v44, 3.7796447
      %v46 = vmul.f32 %v37, %v45
      %47 = vst.msk [vmem:[#allocation2] sm:$0xff] %vm39, %v46
    $region25: #{tpu_custom_call.1} parent=1 // pred_fallthru
      _
    %v48 = vld [vmem:[#allocation5] sm:$0xff]
    %v49 = vmul.f32 %v48, %v48
    %vm50 = vcmask 261120
    %v51 = vsel %vm50, %v49, 0.0
    %52 = vadd.xlane.f32.xlu0 %v51
    %v53 = vpop.xlane.xlu0 %52
    %v54 = vmax.f32 %v53, 1e-24
    %v55 = vrsqrt.pop %v54
    %v56 = vmul.f32 %v55, 3.7796447
    %v57 = vmul.f32 %v48, %v56
    %v58 = vld [vmem:[#allocation2] sm:$0xff]
    %v60 = vsel %vm50, %v57, 0
    %v63 = vsel %vm50, %v58, 0
    %65 = vmatprep.subr.mxu0 0.0
    %66 = vmatpush1.xpose.msra.mxu0 %v63
    %67 = vmatprep.subr.mxu0 0.0
    %68 = vmatpush1.xpose.msra.mxu0 0.0
    %69 = vmatprep.subr.mxu0 0.0
    %70 = vmatpush1.xpose.msra.mxu0 0.0
    %71 = vmatprep.subr.mxu0 0.0
    %72 = vmatpush1.xpose.msra.mxu0 0.0
    %73 = vmatprep.subr.mxu0 0.0
    %74 = vmatpush1.xpose.msra.mxu0 0.0
    %75 = vmatprep.subr.mxu0 0.0
    %76 = vmatpush1.xpose.msra.mxu0 0.0
    %77 = vmatprep.subr.mxu0 0.0
    %78 = vmatpush1.xpose.msra.mxu0 0.0
    %79 = vmatprep.subr.mxu0 0.0
    %80 = vmatpush1.xpose.msra.mxu0 0.0
    %81 = vmatprep.subr.mxu0 0.0
    %82 = vmatpush1.xpose.msra.mxu0 0.0
    %83 = vmatprep.subr.mxu0 0.0
    %84 = vmatpush1.xpose.msra.mxu0 0.0
    %85 = vmatprep.subr.mxu0 0.0
    %86 = vmatpush1.xpose.msra.mxu0 0.0
    %87 = vmatprep.subr.mxu0 0.0
    %88 = vmatpush1.xpose.msra.mxu0 0.0
    %89 = vmatprep.subr.mxu0 0.0
    %90 = vmatpush1.xpose.msra.mxu0 0.0
    %91 = vmatprep.subr.mxu0 0.0
    %92 = vmatpush1.xpose.msra.mxu0 0.0
    %93 = vmatprep.subr.mxu0 0.0
    %94 = vmatpush1.xpose.msra.mxu0 0.0
    %95 = vmatprep.subr.mxu0 0.0
    %96 = vmatpush1.xpose.msra.mxu0 0.0
    %97 = vmatprep.subr.mxu0 0.0
    %98 = vmatpush1.xpose.msra.mxu0 0.0
    %99 = vmatprep.subr.mxu0 0.0
    %100 = vmatpush1.xpose.msra.mxu0 0.0
    %101 = vmatprep.subr.mxu0 0.0
    %102 = vmatpush1.xpose.msra.mxu0 0.0
    %103 = vmatprep.subr.mxu0 0.0
    %104 = vmatpush1.xpose.msra.mxu0 0.0
    %105 = vmatprep.subr.mxu0 0.0
    %106 = vmatpush1.xpose.msra.mxu0 0.0
    %107 = vmatprep.subr.mxu0 0.0
    %108 = vmatpush1.xpose.msra.mxu0 0.0
    %109 = vmatprep.subr.mxu0 0.0
    %110 = vmatpush1.xpose.msra.mxu0 0.0
    %111 = vmatprep.subr.mxu0 0.0
    %112 = vmatpush1.xpose.msra.mxu0 0.0
    %113 = vmatprep.subr.mxu0 0.0
    %114 = vmatpush1.xpose.msra.mxu0 0.0
    %115 = vmatprep.subr.mxu0 0.0
    %116 = vmatpush1.xpose.msra.mxu0 0.0
    %117 = vmatprep.subr.mxu0 0.0
    %118 = vmatpush1.xpose.msra.mxu0 0.0
    %119 = vmatprep.subr.mxu0 0.0
    %120 = vmatpush1.xpose.msra.mxu0 0.0
    %121 = vmatprep.subr.mxu0 0.0
    %122 = vmatpush1.xpose.msra.mxu0 0.0
    %123 = vmatprep.subr.mxu0 0.0
    %124 = vmatpush1.xpose.msra.mxu0 0.0
    %125 = vmatprep.subr.mxu0 0.0
    %126 = vmatpush1.xpose.msra.mxu0 0.0
    %127 = vmatprep.subr.mxu0 0.0
    %128 = vmatpush1.xpose.msra.mxu0 0.0
    %129 = vmatprep.mubr.f32.mxu0 0.0
    %130 = vmatmul.mubr.f32.gmra.mrb[0].mxu0 %v60
    %v131 = vpop.f32.mrb[0].mxu0
    %v132 = vadd.f32 0.0, %v131
    %v133 = vpop.f32.mrb[0].mxu0
    %134 = vdwg.mxu0
    %v135 = vmul.f32 %v132, 1.442695
    %v136 = vpow.pop %v135
    %s137 = smul.u32 0, 8
    %v138 = vlaneseq
    %v139 = vshrl.u32 %v138, 7
    %v140 = vstv %s137
    %v141 = vadd.s32 %v140, %v139
    %s142 = smul.u32 0, 8
    %v143 = vlaneseq
    %v144 = vand.u32 %v143, 127
    %v145 = vstv %s142
    %v146 = vadd.s32 %v145, %v144
    %vm147 = vcmp.ne.s32.totalorder %v141, %v146
    %v148 = vld [vmem:[%s2] sm:$0xff]
    %v149 = vld [vmem:[%s3] sm:$0x1]
    %150 = vset.pattern.permute.xlu0 0
    %151 = vperm.xlu0 %150, %v148
    %v152 = vpop.permute.xlu0 %151
    %v153 = vlaneseq
    %v154 = vshrl.u32 %v153, 7
    %v155 = vsub.s32 0, %v154
    %v156 = vrot.slane %v149, %v155
    %vm157 = vcmp.eq.s32.totalorder %v152, %v156
    %v158 = vsel %vm147, %v136, 0.0
    %v159 = vld [vmem:[#allocation4] sm:$0x1]
    %vm160 = vcmask 64512
    %v161 = vsel %vm160, %v158, 0.0
    %v162 = vrot.slane %v161, 4
    %v163 = vadd.f32 %v161, %v162
    %v164 = vrot.slane %v163, 2
    %v165 = vadd.f32 %v163, %v164
    %v166 = vrot.slane %v165, 1
    %v167 = vadd.f32 %v165, %v166
    %v168 = vadd.f32 %v159, %v167
    %vm169 = vcmask 57344
    %170 = vst.msk [vmem:[#allocation4] sm:$0x1] %vm169, %v168
    %v171 = vld [vmem:[#allocation3] sm:$0x1]
    %v172 = vsel %vm157, %v158, 0.0
    %v173 = vsel %vm160, %v172, 0.0
    %v174 = vrot.slane %v173, 4
    %v175 = vadd.f32 %v173, %v174
    %v176 = vrot.slane %v175, 2
    %v177 = vadd.f32 %v175, %v176
    %v178 = vrot.slane %v177, 1
    %v179 = vadd.f32 %v177, %v178
    %v180 = vadd.f32 %v171, %v179
    %181 = vst.msk [vmem:[#allocation3] sm:$0x1] %vm169, %v180
    // Predicated region
    $region26: #{tpu_custom_call.1} parent=1 // pred_check
      %p182 = pneg %p30
    $region27: #{tpu_custom_call.1} parent=1 // pred_check_branch
      %184 = sbr.rel (%p182) target = $region29
    $region28: #{tpu_custom_call.1} parent=1 // pred_region
      %v185 = vld [vmem:[#allocation4] sm:$0x1]
      %v186 = vld [vmem:[#allocation3] sm:$0x1]
      %v187 = vmul.f32 %v185, 1e-07
      %v188 = vadd.f32 %v186, %v187
      %v189 = vrcp.pop %v185
      %v190 = vmul.f32 %v188, %v189
      %v191 = vlog2.pop %v190
      %v192 = vmul.f32 %v191, 0.6931472
      %193 = vst.msk [vmem:[#allocation8] sm:$0x1] %vm169, %v192
    $region29: #{tpu_custom_call.1} parent=1 // pred_fallthru
      _
    // Predicated region
    $region30: #{tpu_custom_call.1} parent=1 // pred_check
      _
    $region31: #{tpu_custom_call.1} parent=1 // pred_check_branch
      %195 = sbr.rel (0) target = $region33
    $region32: #{tpu_custom_call.1} parent=1 // pred_region
      %s197 = ssub.s32 16, 16
      %198 = vsyncadd [#allocation7], %s197
      %s200 = sshll.u32 [#allocation8], 4
      %s201 = int_to_ptr.vmem [resolvable:$true] %s200
      %203 = dma.vmem_to_hbm [thread:$0]  %s201, 16, %s4, [#allocation7]
    $region33: #{tpu_custom_call.1} parent=1 // pred_fallthru
      _
    // Predicated region
    $region34: #{tpu_custom_call.1} parent=1 // pred_check
      _
    $region35: #{tpu_custom_call.1} parent=1 // pred_check_branch
      %205 = sbr.rel (0) target = $region37
    $region36: #{tpu_custom_call.1} parent=1 // pred_region
      %206 = dma.done [#allocation7], 16
    $region37: #{tpu_custom_call.1} parent=1 // pred_fallthru
      _
    %207 = vsyncpa [#allocation6], 1
    %208 = vsyncpa [#allocation7], 1

</llo_original>
